<compile_context>
chip_gen: v6e
topology: v6e:2x2x1
jax: 0.10.0
libtpu: 0.0.40
codegen_flags: <defaults>
</compile_context>

<pallas_src>
import functools

import jax
import jax.numpy as jnp
import numpy as np
from jax.experimental import pallas as pl
from jax.experimental.pallas import tpu as pltpu

_LANES = 128


def _cdiv(a, b):
    return -(-a // b)


def _round_up(x, m):
    return ((x + m - 1) // m) * m


def _tpu_defaults():
    """Return (vmem_capacity_bytes, default num_chunks).

    v7x has 64 MiB VMEM per TensorCore and 2 TCs per chip -> split the batch in 2
    "parallel" chunks; v5e/v6e have 128 MiB and a single TC -> 1 chunk.
    """
    try:
        info = pltpu.get_tpu_info()
        vmem = int(getattr(info, "vmem_capacity_bytes", 64 << 20))
    except Exception:
        vmem = 64 << 20
    num_chunks = 2 if vmem <= (64 << 20) else 1
    return vmem, num_chunks


def _ce_kernel_small(cls_row_ref, probs_ref, tgt_ref, out_ref, *,
                     true_b, tb, tiles_per_chunk):
    """Fast path (MC <= 128): no selector matmul.

    cls_row_ref : (1, MC)   int32   class index of each column (VMEM-resident)
    probs_ref   : (TB, MC)  p dtype batch tile of probabilities
    tgt_ref     : (TB, 1)   int32   labels for this tile
    out_ref     : (1, 8, MC) f32    per-chunk accumulator of log(p_target)
    """
    g = pl.program_id(0)
    t = pl.program_id(1)

    @pl.when(t == 0)
    def _():
        out_ref[...] = jnp.zeros_like(out_ref)

    # In-kernel ragged-tail handling: rows at or past the true batch size contribute 0.
    tile_start = (g * tiles_per_chunk + t) * tb
    row = jax.lax.broadcasted_iota(jnp.int32, (tb, 1), 0)
    valid = (row + tile_start) < true_b                              # (TB, 1)

    hit = (cls_row_ref[...] == tgt_ref[...]) & valid                 # (TB, MC)
    p = jnp.where(hit, probs_ref[...].astype(jnp.float32), 1.0)
    logp = jnp.log(p)                                                # 0 on non-hit / masked rows

    # Per-vreg partial sums: pure VPU adds in the hot loop; 8->1 sublane reduce, negation
    # and 1/(B*M) scaling happen once in the wrapper.
    partial = jnp.sum(logp.reshape(tb // 8, 8, -1), axis=0)          # (8, MC)
    out_ref[...] += partial[None]


def _ce_kernel_big(cls_row_ref, sel_ref, probs_ref, tgt_ref, out_ref, *,
                   true_b, tb, tiles_per_chunk):
    """General path (MC > 128): one-hot MXU gather to (TB, 128) before the log,
    so the EUP only sees num_models lanes worth of useful work per row."""
    g = pl.program_id(0)
    t = pl.program_id(1)

    @pl.when(t == 0)
    def _():
        out_ref[...] = jnp.zeros_like(out_ref)

    tile_start = (g * tiles_per_chunk + t) * tb
    row = jax.lax.broadcasted_iota(jnp.int32, (tb, 1), 0)
    valid = (row + tile_start) < true_b                              # (TB, 1)

    probs = probs_ref[...]
    hit = cls_row_ref[...] == tgt_ref[...]                           # (TB, MC)
    masked = jnp.where(hit, probs, jnp.zeros_like(probs))            # one nonzero per model slice
    p_tgt = jnp.dot(masked, sel_ref[...],
                    preferred_element_type=jnp.float32)              # (TB, 128) f32

    # Ragged/overhang rows -> 1 -> log == 0.  Lanes >= num_models hold log(0) = -inf,
    # but the wrapper only ever reads lanes [:num_models] (pad-bias operand dropped).
    p = jnp.where(valid, p_tgt, 1.0)
    logp = jnp.log(p)
    partial = jnp.sum(logp.reshape(tb // 8, 8, _LANES), axis=0)      # (8, 128)
    out_ref[...] += partial[None]


def ensemble_cross_entropy(probs, target, num_models, num_classes, *,
                           batch_tile=None, num_chunks=None):
    """JAX wrapper mirroring EnsembleCrossEntropy.forward.

    probs : (B, num_models*num_classes) float32 or bfloat16 (per-model probability slices)
    target: (B,) integer class labels in [0, num_classes)
    Returns (total_loss, [per_model_loss_0, ..., per_model_loss_{M-1}]).
    """
    B, MC = probs.shape
    M, C = num_models, num_classes
    assert M * C == MC, "probs last dim must equal num_models * num_classes"
    assert B >= 1

    dtype = probs.dtype
    itemsize = dtype.itemsize
    use_fast = MC <= _LANES
    if not use_fast:
        assert M <= _LANES, "num_models > 128 needs a wider gather output"
    lanes_out = MC if use_fast else _LANES

    # ---- generation-aware sizing --------------------------------------------------
    vmem_cap, default_chunks = _tpu_defaults()
    if num_chunks is None:
        num_chunks = default_chunks
    num_chunks = max(1, int(num_chunks))

    # dtype-native sublane packing: 8 rows (f32), 16 (bf16), 32 (int8/fp8)
    pack = max(8, 8 * (4 // max(1, itemsize)))

    # Resident operands (constant index_map -> one VMEM copy for the whole grid).
    resident = 8 * MC * 4                                   # cls_row (sublane-padded)
    if not use_fast:
        resident += MC * _LANES * itemsize                  # one-hot model selector
    resident += 2 * 8 * lanes_out * 4 * num_chunks          # accumulator blocks (generous)
    # TODO(synk): tile the class axis as a 3rd grid dim when MC is so large (big vocab)
    # that the resident selector crowds out the probs-tile budget.

    # Streaming budget for the double-buffered probs + target tiles.
    stream_budget = (22 << 20) if vmem_cap <= (64 << 20) else (48 << 20)
    stream_budget = max(2 << 20, stream_budget - resident)

    # A (TB,1) int32 block is lane-padded to 128 lanes in VMEM -> 512 B/row; budget it.
    # TODO(synk): a lane-major target layout + one in-kernel XLU relayout would shrink this.
    per_row = MC * itemsize + 512
    tb_cap = max(pack, (stream_budget // (2 * per_row)) // pack * pack)
    tb_target = _round_up(max(1, _cdiv(4 << 20, MC * itemsize)), pack)   # ~4 MiB probs/step
    tb = min(tb_cap, tb_target)
    tb = min(tb, _round_up(_cdiv(B, num_chunks), pack))     # don't over-allocate for small B
    if batch_tile is not None:
        tb = min(tb, _round_up(int(batch_tile), pack))
    tb = max(pack, (tb // pack) * pack)

    n_tiles = _cdiv(B, tb)            # tiles over the TRUE batch (no padded copy of probs)
    num_chunks = min(num_chunks, n_tiles)
    tiles_per_chunk = _cdiv(n_tiles, num_chunks)

    # ---- small side inputs ---------------------------------------------------------
    target_2d = target.astype(jnp.int32).reshape(B, 1)
    cls_row = (jnp.arange(MC, dtype=jnp.int32) % C).reshape(1, MC)

    def _tile(g, t):
        # Clamp so "overhang" steps (tiles_per_chunk*num_chunks > n_tiles) re-read the last
        # valid block; their rows are fully masked in-kernel and contribute 0.
        return jnp.minimum(g * tiles_per_chunk + t, n_tiles - 1)

    in_specs = [pl.BlockSpec((1, MC), lambda g, t: (0, 0))]          # cls_row (resident)
    operands = [cls_row]
    if use_fast:
        kernel = functools.partial(_ce_kernel_small, true_b=B, tb=tb,
                                   tiles_per_chunk=tiles_per_chunk)
    else:
        col = np.arange(MC)[:, None]
        lane = np.arange(_LANES)[None, :]
        selector = jnp.asarray(col // C == lane, dtype=dtype)        # (MC, 128) one-hot
        in_specs.append(pl.BlockSpec((MC, _LANES), lambda g, t: (0, 0)))
        operands.append(selector)
        kernel = functools.partial(_ce_kernel_big, true_b=B, tb=tb,
                                   tiles_per_chunk=tiles_per_chunk)
    in_specs += [
        pl.BlockSpec((tb, MC), lambda g, t: (_tile(g, t), 0)),       # probs tile
        pl.BlockSpec((tb, 1), lambda g, t: (_tile(g, t), 0)),        # target tile
    ]
    operands += [probs, target_2d]

    vmem_need = resident + 2 * tb * per_row
    assert vmem_need + (2 << 20) < vmem_cap, "tile sizing exceeded this chip's VMEM"
    vmem_limit = int(min(max(vmem_need + (8 << 20), 32 << 20), vmem_cap - (4 << 20)))

    cost = pl.CostEstimate(
        flops=int((2 * _LANES if not use_fast else 6) * B * MC),
        transcendentals=int(B * lanes_out),
        bytes_accessed=int(B * MC * itemsize + B * 4 + resident
                           + num_chunks * 8 * lanes_out * 4),
    )

    out = pl.pallas_call(
        kernel,
        out_shape=jax.ShapeDtypeStruct((num_chunks, 8, lanes_out), jnp.float32),
        grid=(num_chunks, tiles_per_chunk),
        in_specs=in_specs,
        out_specs=pl.BlockSpec((1, 8, lanes_out), lambda g, t: (g, 0, 0)),
        compiler_params=pltpu.CompilerParams(
            dimension_semantics=("parallel", "arbitrary"),
            vmem_limit_bytes=vmem_limit),
        cost_estimate=cost,
    )(*operands)

    # Finalize in the wrapper: chunk + sublane reduce, per-model lane grouping, negation and
    # the 1/(B*M) scale using the TRUE batch size.
    col_sums = jnp.sum(out, axis=(0, 1))                             # (lanes_out,)
    if use_fast:
        per_model_logsum = col_sums.reshape(M, C).sum(axis=1)        # (M,)
    else:
        per_model_logsum = col_sums[:M]                              # lanes >= M may be -inf; dropped
    per_model = per_model_logsum * (-1.0 / (B * M))
    total = jnp.sum(per_model)
    return total, [per_model[m] for m in range(M)]


def _reference(probs, target, num_models, num_classes):
    B = probs.shape[0]
    p32 = probs.astype(jnp.float32)
    losses = []
    for m in range(num_models):
        p = p32[:, m * num_classes:(m + 1) * num_classes]
        nll = -jnp.log(p[jnp.arange(B), target])
        losses.append(jnp.mean(nll) / num_models)
    return sum(losses), losses


def _check(total, loss_list, probs, target, M, C, rtol, atol):
    ref_total, ref_list = _reference(probs, target, M, C)
    np.testing.assert_allclose(np.asarray(total), np.asarray(ref_total), rtol=rtol, atol=atol)
    for got, want in zip(loss_list, ref_list):
        np.testing.assert_allclose(np.asarray(got), np.asarray(want), rtol=rtol, atol=atol)


if __name__ == "__main__":
    key = jax.random.PRNGKey(0)
    k1, k2, k3, k4, k5, k6, k7, k8 = jax.random.split(key, 8)

    # 1) f32, MC == 128, single tile (fast path; matches the PyTorch module's default dtype)
    M, C = 4, 32
    B = 8
    probs = jax.nn.softmax(jax.random.normal(k1, (B, M, C), jnp.float32), axis=-1).reshape(B, M * C)
    target = jax.random.randint(k2, (B,), 0, C, dtype=jnp.int32)
    total, losses = ensemble_cross_entropy(probs, target, M, C)
    jax.block_until_ready(total)
    _check(total, losses, probs, target, M, C, 1e-5, 1e-5)

    # 2) bf16, ragged batch inside a single tile (in-kernel row masking, no padded probs copy)
    B = 12
    probs = jax.nn.softmax(jax.random.normal(k3, (B, M, C), jnp.float32),
                           axis=-1).reshape(B, M * C).astype(jnp.bfloat16)
    target = jax.random.randint(k4, (B,), 0, C, dtype=jnp.int32)
    total, losses = ensemble_cross_entropy(probs, target, M, C)
    jax.block_until_ready(total)
    _check(total, losses, probs, target, M, C, 1e-4, 1e-4)

    # 3) bf16, forced small tiles -> multi-tile, 2 chunks, ragged last tile + fully-masked
    #    overhang step (exercises the clamp-and-mask path)
    B = 300
    probs = jax.nn.softmax(jax.random.normal(k5, (B, M, C), jnp.float32),
                           axis=-1).reshape(B, M * C).astype(jnp.bfloat16)
    target = jax.random.randint(k6, (B,), 0, C, dtype=jnp.int32)
    total, losses = ensemble_cross_entropy(probs, target, M, C, batch_tile=64, num_chunks=2)
    jax.block_until_ready(total)
    _check(total, losses, probs, target, M, C, 1e-4, 1e-4)

    # 4) f32, MC > 128 -> general path with the one-hot MXU gather
    M2, C2 = 4, 40
    B = 16
    probs = jax.nn.softmax(jax.random.normal(k7, (B, M2, C2), jnp.float32),
                           axis=-1).reshape(B, M2 * C2)
    target = jax.random.randint(k8, (B,), 0, C2, dtype=jnp.int32)
    total, losses = ensemble_cross_entropy(probs, target, M2, C2, num_chunks=2)
    jax.block_until_ready(total)
    _check(total, losses, probs, target, M2, C2, 1e-5, 1e-5)

    print("KERNEL_OK")
</pallas_src>

<mosaic_0001>
module attributes {stable_mosaic.version = 11 : i64} {
  func.func @_ce_kernel_small(%arg0: i32, %arg1: i32, %arg2: memref<1x128xi32, #tpu.memory_space<vmem>>, %arg3: memref<8x128xf32, #tpu.memory_space<vmem>>, %arg4: memref<8x1xi32, #tpu.memory_space<vmem>>, %arg5: memref<1x8x128xf32, #tpu.memory_space<vmem>>) attributes {dimension_semantics = [#tpu.dimension_semantics<parallel>, #tpu.dimension_semantics<arbitrary>], iteration_bounds = array<i64: 1, 1>, scalar_prefetch = 0 : i64, scratch_operands = 0 : i64, tpu.core_type = #tpu.core_type<tc>, window_params = [{pipeline_mode = #tpu.pipeline_mode<synchronous>, transform_indices = @transform_0, window_bounds = array<i64: 1, 128>}, {transform_indices = @transform_1, window_bounds = array<i64: 8, 128>}, {transform_indices = @transform_2, window_bounds = array<i64: 8, 1>}, {transform_indices = @transform_3, window_bounds = array<i64: 1, 8, 128>}]} {
    %c0_i32 = arith.constant 0 : i32
    %0 = arith.cmpi eq, %arg1, %c0_i32 : i32
    %1 = arith.extui %0 : i1 to i32
    %c0_i32_0 = arith.constant 0 : i32
    %2 = arith.cmpi ne, %1, %c0_i32_0 : i32
    scf.if %2 {
      %cst_14 = arith.constant 0.000000e+00 : f32
      %28 = vector.broadcast %cst_14 : f32 to vector<1x8x128xf32>
      %c0_15 = arith.constant 0 : index
      %c0_16 = arith.constant 0 : index
      %c0_17 = arith.constant 0 : index
      %29 = vector.load %arg5[%c0_15, %c0_16, %c0_17] : memref<1x8x128xf32, #tpu.memory_space<vmem>>, vector<1x8x128xf32>
      tpu.vector_store %arg5[%c0_15, %c0_16, %c0_17], %28 {strides = array<i32>} : memref<1x8x128xf32, #tpu.memory_space<vmem>>, vector<1x8x128xf32>,
    } else {
    }
    %c1_i32 = arith.constant 1 : i32
    %3 = arith.muli %arg0, %c1_i32 : i32
    %4 = arith.addi %3, %arg1 : i32
    %c8_i32 = arith.constant 8 : i32
    %5 = arith.muli %4, %c8_i32 : i32
    %6 = tpu.iota {dimensions = array<i32: 0>} : vector<8x1xi32>
    %7 = vector.broadcast %5 : i32 to vector<8x1xi32>
    %8 = arith.addi %6, %7 : vector<8x1xi32>
    %c8_i32_1 = arith.constant 8 : i32
    %9 = vector.broadcast %c8_i32_1 : i32 to vector<8x1xi32>
    %10 = arith.cmpi slt, %8, %9 : vector<8x1xi32>
    %c0 = arith.constant 0 : index
    %c0_2 = arith.constant 0 : index
    %11 = vector.load %arg2[%c0, %c0_2] : memref<1x128xi32, #tpu.memory_space<vmem>>, vector<1x128xi32>
    %c0_3 = arith.constant 0 : index
    %c0_4 = arith.constant 0 : index
    %12 = vector.load %arg4[%c0_3, %c0_4] : memref<8x1xi32, #tpu.memory_space<vmem>>, vector<8x1xi32>
    %13 = vector.broadcast %11 : vector<1x128xi32> to vector<8x128xi32>
    %14 = vector.broadcast %12 : vector<8x1xi32> to vector<8x128xi32>
    %15 = arith.cmpi eq, %13, %14 : vector<8x128xi32>
    %16 = vector.broadcast %10 : vector<8x1xi1> to vector<8x128xi1>
    %17 = arith.andi %15, %16 : vector<8x128xi1>
    %c0_5 = arith.constant 0 : index
    %c0_6 = arith.constant 0 : index
    %18 = vector.load %arg3[%c0_5, %c0_6] : memref<8x128xf32, #tpu.memory_space<vmem>>, vector<8x128xf32>
    %cst = arith.constant 1.000000e+00 : f32
    %19 = vector.broadcast %cst : f32 to vector<8x128xf32>
    %20 = arith.select %17, %18, %19 : vector<8x128xi1>, vector<8x128xf32>
    %21 = math.log %20 : vector<8x128xf32>
    %22 = vector.shape_cast %21 : vector<8x128xf32> to vector<1x8x128xf32>
    %cst_7 = arith.constant dense<0.000000e+00> : vector<8x128xf32>
    %23 = vector.multi_reduction <add>, %22, %cst_7 [0] : vector<1x8x128xf32> to vector<8x128xf32>
    %c0_8 = arith.constant 0 : index
    %c0_9 = arith.constant 0 : index
    %c0_10 = arith.constant 0 : index
    %24 = vector.load %arg5[%c0_8, %c0_9, %c0_10] : memref<1x8x128xf32, #tpu.memory_space<vmem>>, vector<1x8x128xf32>
    %25 = vector.shape_cast %23 : vector<8x128xf32> to vector<1x8x128xf32>
    %26 = arith.addf %24, %25 : vector<1x8x128xf32>
    %c0_11 = arith.constant 0 : index
    %c0_12 = arith.constant 0 : index
    %c0_13 = arith.constant 0 : index
    %27 = vector.load %arg5[%c0_11, %c0_12, %c0_13] : memref<1x8x128xf32, #tpu.memory_space<vmem>>, vector<1x8x128xf32>
    tpu.vector_store %arg5[%c0_11, %c0_12, %c0_13], %26 {strides = array<i32>} : memref<1x8x128xf32, #tpu.memory_space<vmem>>, vector<1x8x128xf32>,
    return
  }
  func.func @transform_0(%arg0: i32, %arg1: i32) -> (i32, i32) {
    %c0_i32 = arith.constant 0 : i32
    %c0_i32_0 = arith.constant 0 : i32
    %c0_i32_1 = arith.constant 0 : i32
    return %c0_i32, %c0_i32_0 : i32, i32
  }
  func.func @transform_1(%arg0: i32, %arg1: i32) -> (i32, i32) {
    %c1_i32 = arith.constant 1 : i32
    %0 = arith.muli %arg0, %c1_i32 : i32
    %1 = arith.addi %0, %arg1 : i32
    %c0_i32 = arith.constant 0 : i32
    %2 = arith.minsi %1, %c0_i32 : i32
    %c0_i32_0 = arith.constant 0 : i32
    %c0_i32_1 = arith.constant 0 : i32
    return %2, %c0_i32_0 : i32, i32
  }
  func.func @transform_2(%arg0: i32, %arg1: i32) -> (i32, i32) {
    %c1_i32 = arith.constant 1 : i32
    %0 = arith.muli %arg0, %c1_i32 : i32
    %1 = arith.addi %0, %arg1 : i32
    %c0_i32 = arith.constant 0 : i32
    %2 = arith.minsi %1, %c0_i32 : i32
    %c0_i32_0 = arith.constant 0 : i32
    %c0_i32_1 = arith.constant 0 : i32
    return %2, %c0_i32_0 : i32, i32
  }
  func.func @transform_3(%arg0: i32, %arg1: i32) -> (i32, i32, i32) {
    %c0_i32 = arith.constant 0 : i32
    %c0_i32_0 = arith.constant 0 : i32
    %c0_i32_1 = arith.constant 0 : i32
    return %arg0, %c0_i32, %c0_i32_0 : i32, i32, i32
  }
}

</mosaic_0001>

<llo_original>
// kernel: tpu_custom_call.1
$region0: #{tpu_custom_call.1}
  #allocation0 [shape = 'u32[]', space=smem, size = 0x4, offset = 0x4, fixed_abs, tag = 'smem constant byte address 0x4 - core index']
  #allocation1 [shape = 'u32[144,128]{1,0:T(1,128)}', space=vmem, size = 0x12000, scoped, tag = 'internal scratch']
  %s0 = inlined_call_operand.vmem [shape: s32[1,128], index: 0, kind: input, shape index: {}]
  %s1 = inlined_call_operand.vmem [shape: f32[8,128], index: 1, kind: input, shape index: {}]
  %s2 = inlined_call_operand.vmem [shape: s32[8,1], index: 2, kind: input, shape index: {}]
  %s3 = inlined_call_operand.hbm [shape: f32[1,8,128], index: 3, kind: output, shape index: {}]
  %s4 = sld [smem:[#allocation0]]
  $region26: #{tpu_custom_call.1} parent=0
    _
  %s6 = ssub.s32 1, %s4
  %s7 = scalar_select 0, %s6, %s4
  $region1: #{tpu_custom_call.1} parent=0
    #allocation2 [shape = 'u8[4096]{0}', space=vmem, size = 0x1000, scoped, tag = 'output window, operand 0, single buffered']
    #allocation3 [shape = 's32[1]{0}', space=sflag, size = 0x4, scoped, tag = 'scoped memory for tpu_custom_call.1']
    %8 = vsyncpa [#allocation3], 0
    // Predicated region
    $region2: #{tpu_custom_call.1} parent=1 // pred_check
      _
    $region3: #{tpu_custom_call.1} parent=1 // pred_check_branch
      %10 = sbr.rel (0) target = $region5
    $region4: #{tpu_custom_call.1} parent=1 // pred_region
      _
    $region5: #{tpu_custom_call.1} parent=1 // pred_fallthru
      _
    // Predicated region
    $region6: #{tpu_custom_call.1} parent=1 // pred_check
      _
    $region7: #{tpu_custom_call.1} parent=1 // pred_check_branch
      %12 = sbr.rel (0) target = $region9
    $region8: #{tpu_custom_call.1} parent=1 // pred_region
      %s13 = sadd.s32 0, 0
      %p14 = scmp.lt.s32.totalorder %s13, 0
      %s15 = scalar_select %p14, %s13, 0
      %p16 = scmp.lt.s32.totalorder %s15, 0
      %s17 = scalar_select %p16, %s15, 0
      %s18 = smul.addr %s17, 8
      %s19 = scalar_lea.vmem %s1, %s18
      %s20 = sadd.s32 0, 0
      %p21 = scmp.lt.s32.totalorder %s20, 0
      %s22 = scalar_select %p21, %s20, 0
    $region9: #{tpu_custom_call.1} parent=1 // pred_fallthru
      _
    // Predicated region
    $region10: #{tpu_custom_call.1} parent=1 // pred_check
      _
    $region11: #{tpu_custom_call.1} parent=1 // pred_check_branch
      %24 = sbr.rel (0) target = $region13
    $region12: #{tpu_custom_call.1} parent=1 // pred_region
      %s25 = sadd.s32 0, 0
      %p26 = scmp.lt.s32.totalorder %s25, 0
      %s27 = scalar_select %p26, %s25, 0
      %p28 = scmp.lt.s32.totalorder %s27, 0
      %s29 = scalar_select %p28, %s27, 0
      %s30 = smul.addr %s29, 8
      %s31 = scalar_lea.vmem %s2, %s30
      %s32 = sadd.s32 0, 0
      %p33 = scmp.lt.s32.totalorder %s32, 0
      %s34 = scalar_select %p33, %s32, 0
    $region13: #{tpu_custom_call.1} parent=1 // pred_fallthru
      _
    %s35 = sadd.s32 0, 0
    %p36 = scmp.lt.s32.totalorder %s35, 0
    %s37 = scalar_select %p36, %s35, 0
    %p38 = scmp.lt.s32.totalorder %s37, 0
    %s39 = scalar_select %p38, %s37, 0
    %s40 = smul.addr %s39, 8
    %s41 = scalar_lea.vmem %s1, %s40
    %s42 = sadd.s32 0, 0
    %p43 = scmp.lt.s32.totalorder %s42, 0
    %s44 = scalar_select %p43, %s42, 0
    %p45 = scmp.lt.s32.totalorder %s44, 0
    %s46 = scalar_select %p45, %s44, 0
    %s47 = smul.addr %s46, 8
    %s48 = scalar_lea.vmem %s2, %s47
    %s49 = sadd.s32 0, 0
    %p50 = scmp.lt.s32.totalorder %s49, 0
    %s51 = scalar_select %p50, %s49, 0
    %p52 = scmp.lt.s32.totalorder %s51, 0
    %s53 = scalar_select %p52, %s51, 0
    %s54 = smul.addr %s53, 8
    %s55 = scalar_lea.vmem %s1, %s54
    %s56 = sadd.s32 0, 0
    %p57 = scmp.lt.s32.totalorder %s56, 0
    %s58 = scalar_select %p57, %s56, 0
    %s59 = sadd.s32 0, 0
    %p60 = scmp.lt.s32.totalorder %s59, 0
    %s61 = scalar_select %p60, %s59, 0
    %p62 = scmp.lt.s32.totalorder %s61, 0
    %s63 = scalar_select %p62, %s61, 0
    %s64 = smul.addr %s63, 8
    %s65 = scalar_lea.vmem %s2, %s64
    %s66 = sadd.s32 0, 0
    %p67 = scmp.lt.s32.totalorder %s66, 0
    %s68 = scalar_select %p67, %s66, 0
    %p69 = scmp.eq.s32.totalorder 0, 0
    // Predicated region
    $region14: #{tpu_custom_call.1} parent=1 // pred_check
      %p70 = pneg %p69
    $region15: #{tpu_custom_call.1} parent=1 // pred_check_branch
      %72 = sbr.rel (%p70) target = $region17
    $region16: #{tpu_custom_call.1} parent=1 // pred_region
      %73 = vst [vmem:[#allocation2] sm:$0xff] 0.0
    $region17: #{tpu_custom_call.1} parent=1 // pred_fallthru
      _
    %s74 = sadd.s32 0, 0
    %s75 = smul.u32 %s74, 8
    %v76 = vlaneseq
    %v77 = vshrl.u32 %v76, 7
    %v78 = vstv %s75
    %v79 = vadd.s32 %v77, %v78
    %vm80 = vcmp.lt.s32.totalorder %v79, 8
    %v81 = vld [vmem:[%s0] sm:$0x1]
    %v82 = vld [vmem:[%s65] sm:$0xff]
    %v83 = vlaneseq
    %v84 = vshrl.u32 %v83, 7
    %v85 = vsub.s32 0, %v84
    %v86 = vrot.slane %v81, %v85
    %87 = vset.pattern.permute.xlu0 0
    %88 = vperm.xlu0 %87, %v82
    %v89 = vpop.permute.xlu0 %88
    %vm90 = vcmp.eq.s32.totalorder %v86, %v89
    %v91 = vsel %vm80, 1, 0
    %vm92 = vcmp.eq.s32.totalorder %v91, 1
    %vm93 = vmand %vm90, %vm92
    %v94 = vld [vmem:[%s55] sm:$0xff]
    %v95 = vsel %vm93, %v94, 1.0
    %v96 = vlog2.pop %v95
    %v97 = vmul.f32 %v96, 0.6931472
    %v98 = vadd.f32 %v97, 0.0
    %v99 = vld [vmem:[#allocation2] sm:$0xff]
    %v100 = vadd.f32 %v99, %v98
    %101 = vst [vmem:[#allocation2] sm:$0xff] %v100
    // Predicated region
    $region18: #{tpu_custom_call.1} parent=1 // pred_check
      _
    $region19: #{tpu_custom_call.1} parent=1 // pred_check_branch
      %103 = sbr.rel (0) target = $region21
    $region20: #{tpu_custom_call.1} parent=1 // pred_region
      %s105 = ssub.s32 128, 128
      %106 = vsyncadd [#allocation3], %s105
      %s108 = sshll.u32 [#allocation2], 4
      %s109 = int_to_ptr.vmem [resolvable:$true] %s108
      %111 = dma.vmem_to_hbm [thread:$0]  %s109, 128, %s3, [#allocation3]
    $region21: #{tpu_custom_call.1} parent=1 // pred_fallthru
      _
    // Predicated region
    $region22: #{tpu_custom_call.1} parent=1 // pred_check
      _
    $region23: #{tpu_custom_call.1} parent=1 // pred_check_branch
      %113 = sbr.rel (0) target = $region25
    $region24: #{tpu_custom_call.1} parent=1 // pred_region
      %114 = dma.done [#allocation3], 128
    $region25: #{tpu_custom_call.1} parent=1 // pred_fallthru
      _
    %115 = vsyncpa [#allocation3], 1

</llo_original>
